<compile_context>
chip_gen: v7x
topology: tpu7x:2x2x1
jax: 0.10.0
libtpu: 0.0.40
codegen_flags: <defaults>
</compile_context>

<pallas_src>
import functools
import math

import jax
import jax.numpy as jnp
import numpy as np
from jax.experimental import pallas as pl
from jax.experimental.pallas import tpu as pltpu


# --------------------------------- kernel -----------------------------------

def _pe_kernel(inv_freq_ref, phase_ref, o_ref, *, tile_rows):
    # inv_freq_ref, phase_ref: [1, 1, d_model] per-column constants (sublane-broadcast).
    # o_ref: [1, tile_rows, d_model] block of the positional-embedding output.
    i = pl.program_id(0)
    row = jax.lax.broadcasted_iota(jnp.int32, o_ref.shape, 1)
    pos = (row + i * tile_rows).astype(jnp.float32)            # global position index
    # cos(x) == sin(x + pi/2): a single EUP sin covers both even (phase 0) and
    # odd (phase pi/2) columns; no separate cos, no select.
    angle = pos * inv_freq_ref[...] + phase_ref[...]
    o_ref[...] = jnp.sin(angle)


# --------------------------------- wrapper -----------------------------------

def positional_embedding(x, d_model, max_len=5000):
    """Pallas equivalent of PositionalEmbedding(d_model, max_len)(x).

    x: array with x.shape[1] == sequence length (only the shape is used, matching
    the PyTorch forward). Returns float32 [1, seq_len, d_model].
    """
    seq_len = x.shape[1]
    assert seq_len <= max_len, "sequence longer than max_len"
    assert d_model % 2 == 0, "d_model must be even (as required by the PyTorch module)"

    # Tiny per-column constants (2 * d_model floats), computed once at trace time.
    k = np.arange(d_model, dtype=np.float32)
    inv_freq = np.exp((np.floor(k / 2.0) * 2.0)
                      * np.float32(-math.log(10000.0) / d_model)).astype(np.float32)
    phase = (np.arange(d_model, dtype=np.int32) % 2).astype(np.float32) \
        * np.float32(math.pi / 2.0)
    inv_freq = jnp.asarray(inv_freq).reshape(1, 1, d_model)
    phase = jnp.asarray(phase).reshape(1, 1, d_model)

    # Biggest row tile that stays comfortably inside VMEM; full extent when small
    # (a block equal to the full array dim is always layout-legal).
    tile_rows = seq_len if seq_len <= 1024 else 1024
    grid = (pl.cdiv(seq_len, tile_rows),)

    const_spec = pl.BlockSpec((1, 1, d_model), lambda i: (0, 0, 0))
    kernel = functools.partial(_pe_kernel, tile_rows=tile_rows)

    return pl.pallas_call(
        kernel,
        out_shape=jax.ShapeDtypeStruct((1, seq_len, d_model), jnp.float32),
        grid=grid,
        in_specs=[const_spec, const_spec],
        out_specs=pl.BlockSpec((1, tile_rows, d_model), lambda i: (0, i, 0)),
        compiler_params=pltpu.CompilerParams(dimension_semantics=("parallel",)),
    )(inv_freq, phase)


# -------------------------------- reference ----------------------------------

def _pe_reference(seq_len, d_model):
    # Mirrors the PyTorch buffer construction in numpy.
    pe = np.zeros((seq_len, d_model), np.float32)
    position = np.arange(0, seq_len, dtype=np.float32)[:, None]
    div_term = np.exp(np.arange(0, d_model, 2, dtype=np.float32)
                      * -(math.log(10000.0) / d_model))
    pe[:, 0::2] = np.sin(position * div_term)
    pe[:, 1::2] = np.cos(position * div_term)
    return pe[None]


# ----------------------------------- main -------------------------------------

if __name__ == "__main__":
    key = jax.random.PRNGKey(0)

    # Small config: batch=2, seq_len=64, d_model=128 (lane-dense last dim).
    B, S, D = 2, 64, 128
    x = jax.random.normal(key, (B, S, D), jnp.float32)
    out = jax.block_until_ready(positional_embedding(x, d_model=D))
    assert out.shape == (1, S, D) and out.dtype == jnp.float32
    np.testing.assert_allclose(np.asarray(out), _pe_reference(S, D),
                               rtol=1e-5, atol=1e-4)

    # Second shape: seq_len not a multiple of 8, narrow d_model (full-extent block).
    S2, D2 = 50, 32
    x2 = jax.random.normal(key, (B, S2, D2), jnp.float32)
    out2 = jax.block_until_ready(positional_embedding(x2, d_model=D2))
    assert out2.shape == (1, S2, D2) and out2.dtype == jnp.float32
    np.testing.assert_allclose(np.asarray(out2), _pe_reference(S2, D2),
                               rtol=1e-5, atol=1e-4)

    print("KERNEL_OK")
</pallas_src>

<mosaic_0001>
module attributes {stable_mosaic.version = 11 : i64} {
  func.func @_pe_kernel(%arg0: i32, %arg1: memref<1x1x128xf32, #tpu.memory_space<vmem>>, %arg2: memref<1x1x128xf32, #tpu.memory_space<vmem>>, %arg3: memref<1x64x128xf32, #tpu.memory_space<vmem>>) attributes {dimension_semantics = [#tpu.dimension_semantics<parallel>], iteration_bounds = array<i64: 1>, scalar_prefetch = 0 : i64, scratch_operands = 0 : i64, tpu.core_type = #tpu.core_type<tc>, window_params = [{pipeline_mode = #tpu.pipeline_mode<synchronous>, transform_indices = @transform_0, window_bounds = array<i64: 1, 1, 128>}, {pipeline_mode = #tpu.pipeline_mode<synchronous>, transform_indices = @transform_1, window_bounds = array<i64: 1, 1, 128>}, {transform_indices = @transform_2, window_bounds = array<i64: 1, 64, 128>}]} {
    %0 = tpu.iota {dimensions = array<i32: 1>} : vector<1x64x128xi32>
    %c64_i32 = arith.constant 64 : i32
    %1 = arith.muli %arg0, %c64_i32 : i32
    %2 = vector.broadcast %1 : i32 to vector<1x64x128xi32>
    %3 = arith.addi %0, %2 : vector<1x64x128xi32>
    %4 = arith.sitofp %3 : vector<1x64x128xi32> to vector<1x64x128xf32>
    %c0 = arith.constant 0 : index
    %c0_0 = arith.constant 0 : index
    %c0_1 = arith.constant 0 : index
    %5 = vector.load %arg1[%c0, %c0_0, %c0_1] : memref<1x1x128xf32, #tpu.memory_space<vmem>>, vector<1x1x128xf32>
    %6 = vector.broadcast %5 : vector<1x1x128xf32> to vector<1x64x128xf32>
    %7 = arith.mulf %4, %6 : vector<1x64x128xf32>
    %c0_2 = arith.constant 0 : index
    %c0_3 = arith.constant 0 : index
    %c0_4 = arith.constant 0 : index
    %8 = vector.load %arg2[%c0_2, %c0_3, %c0_4] : memref<1x1x128xf32, #tpu.memory_space<vmem>>, vector<1x1x128xf32>
    %9 = vector.broadcast %8 : vector<1x1x128xf32> to vector<1x64x128xf32>
    %10 = arith.addf %7, %9 : vector<1x64x128xf32>
    %11 = math.sin %10 : vector<1x64x128xf32>
    %c0_5 = arith.constant 0 : index
    %c0_6 = arith.constant 0 : index
    %c0_7 = arith.constant 0 : index
    %12 = vector.load %arg3[%c0_5, %c0_6, %c0_7] : memref<1x64x128xf32, #tpu.memory_space<vmem>>, vector<1x64x128xf32>
    tpu.vector_store %arg3[%c0_5, %c0_6, %c0_7], %11 {strides = array<i32>} : memref<1x64x128xf32, #tpu.memory_space<vmem>>, vector<1x64x128xf32>,
    return
  }
  func.func @transform_0(%arg0: i32) -> (i32, i32, i32) {
    %c0_i32 = arith.constant 0 : i32
    %c0_i32_0 = arith.constant 0 : i32
    %c0_i32_1 = arith.constant 0 : i32
    %c0_i32_2 = arith.constant 0 : i32
    return %c0_i32, %c0_i32_0, %c0_i32_1 : i32, i32, i32
  }
  func.func @transform_1(%arg0: i32) -> (i32, i32, i32) {
    %c0_i32 = arith.constant 0 : i32
    %c0_i32_0 = arith.constant 0 : i32
    %c0_i32_1 = arith.constant 0 : i32
    %c0_i32_2 = arith.constant 0 : i32
    return %c0_i32, %c0_i32_0, %c0_i32_1 : i32, i32, i32
  }
  func.func @transform_2(%arg0: i32) -> (i32, i32, i32) {
    %c0_i32 = arith.constant 0 : i32
    %c0_i32_0 = arith.constant 0 : i32
    %c0_i32_1 = arith.constant 0 : i32
    return %c0_i32, %arg0, %c0_i32_0 : i32, i32, i32
  }
}

</mosaic_0001>

<llo_original>
// kernel: tpu_custom_call.1
$region0: #{tpu_custom_call.1}
  #allocation0 [shape = 'u32[]', space=smem, size = 0x4, offset = 0x4, fixed_abs, tag = 'smem constant byte address 0x4 - core index']
  #allocation1 [shape = 'u32[144,128]{1,0:T(1,128)}', space=vmem, size = 0x12000, scoped, tag = 'internal scratch']
  %s0 = inlined_call_operand.hbm [shape: f32[1,1,128], index: 0, kind: input, shape index: {}]
  %s1 = inlined_call_operand.vmem [shape: f32[1,1,128], index: 1, kind: input, shape index: {}]
  %s2 = inlined_call_operand.hbm [shape: f32[1,64,128], index: 2, kind: output, shape index: {}]
  %s3 = sld [smem:[#allocation0]]
  $region22: #{tpu_custom_call.1} parent=0
    _
  %s5 = ssub.s32 1, %s3
  %s6 = scalar_select 0, %s5, %s3
  $region1: #{tpu_custom_call.1} parent=0
    #allocation2 [shape = 'u8[512]{0}', space=vmem, size = 0x400, scoped, tag = 'input window, operand 0, single buffered']
    #allocation3 [shape = 's32[1]{0}', space=sflag, size = 0x4, scoped, tag = 'scoped memory for tpu_custom_call.1']
    #allocation4 [shape = 's32[1]{0}', space=sflag, size = 0x4, scoped, tag = 'scoped memory for tpu_custom_call.1']
    #allocation5 [shape = 'u8[32768]{0}', space=vmem, size = 0x8000, scoped, tag = 'output window, operand 0, single buffered']
    %7 = vsyncpa [#allocation3], 0
    %8 = vsyncpa [#allocation4], 0
    // Predicated region
    $region2: #{tpu_custom_call.1} parent=1 // pred_check
      _
    $region3: #{tpu_custom_call.1} parent=1 // pred_check_branch
      %10 = sbr.rel (0) target = $region5
    $region4: #{tpu_custom_call.1} parent=1 // pred_region
      %s12 = ssub.s32 16, 16
      %13 = vsyncadd [#allocation3], %s12
      %s15 = sshll.u32 [#allocation2], 4
      %s16 = int_to_ptr.vmem [resolvable:$true] %s15
      %18 = dma.hbm_to_vmem [thread:$0]  %s0, 16, %s16, [#allocation3]
    $region5: #{tpu_custom_call.1} parent=1 // pred_fallthru
      _
    // Predicated region
    $region6: #{tpu_custom_call.1} parent=1 // pred_check
      _
    $region7: #{tpu_custom_call.1} parent=1 // pred_check_branch
      %20 = sbr.rel (0) target = $region9
    $region8: #{tpu_custom_call.1} parent=1 // pred_region
      _
    $region9: #{tpu_custom_call.1} parent=1 // pred_fallthru
      _
    // Predicated region
    $region10: #{tpu_custom_call.1} parent=1 // pred_check
      _
    $region11: #{tpu_custom_call.1} parent=1 // pred_check_branch
      %22 = sbr.rel (0) target = $region13
    $region12: #{tpu_custom_call.1} parent=1 // pred_region
      %23 = dma.done [#allocation3], 16
    $region13: #{tpu_custom_call.1} parent=1 // pred_fallthru
      _
    %v24 = vlaneseq
    %v25 = vshrl.u32 %v24, 7
    %v26 = vadd.s32 %v25, 8
    %v27 = vadd.s32 %v25, 16
    %v28 = vadd.s32 %v25, 24
    %v29 = vadd.s32 %v25, 32
    %v30 = vadd.s32 %v25, 40
    %v31 = vadd.s32 %v25, 48
    %v32 = vadd.s32 %v25, 56
    %s33 = smul.u32 0, 64
    %v34 = vstv %s33
    %v35 = vadd.s32 %v25, %v34
    %v36 = vadd.s32 %v26, %v34
    %v37 = vadd.s32 %v27, %v34
    %v38 = vadd.s32 %v28, %v34
    %v39 = vadd.s32 %v29, %v34
    %v40 = vadd.s32 %v30, %v34
    %v41 = vadd.s32 %v31, %v34
    %v42 = vadd.s32 %v32, %v34
    %v43 = vcvt.s32.f32 %v35
    %v44 = vcvt.s32.f32 %v36
    %v45 = vcvt.s32.f32 %v37
    %v46 = vcvt.s32.f32 %v38
    %v47 = vcvt.s32.f32 %v39
    %v48 = vcvt.s32.f32 %v40
    %v49 = vcvt.s32.f32 %v41
    %v50 = vcvt.s32.f32 %v42
    %v51 = vld [vmem:[#allocation2] sm:$0x1]
    %v53 = vlaneseq
    %v54 = vshrl.u32 %v53, 7
    %v55 = vsub.s32 0, %v54
    %v56 = vrot.slane %v51, %v55
    %v58 = vmul.f32 %v43, %v56
    %v59 = vmul.f32 %v44, %v56
    %v60 = vmul.f32 %v45, %v56
    %v61 = vmul.f32 %v46, %v56
    %v62 = vmul.f32 %v47, %v56
    %v63 = vmul.f32 %v48, %v56
    %v64 = vmul.f32 %v49, %v56
    %v65 = vmul.f32 %v50, %v56
    %v66 = vld [vmem:[%s1] sm:$0x1]
    %v68 = vlaneseq
    %v69 = vshrl.u32 %v68, 7
    %v70 = vsub.s32 0, %v69
    %v71 = vrot.slane %v66, %v70
    %v73 = vadd.f32 %v58, %v71
    %v74 = vadd.f32 %v59, %v71
    %v75 = vadd.f32 %v60, %v71
    %v76 = vadd.f32 %v61, %v71
    %v77 = vadd.f32 %v62, %v71
    %v78 = vadd.f32 %v63, %v71
    %v79 = vadd.f32 %v64, %v71
    %v80 = vadd.f32 %v65, %v71
    %v81 = vand.u32 2147483647, %v73
    %vm82 = vcmp.le.f32.partialorder %v81, 0.7853982
    %vm83 = vcmp.lt.s32.totalorder %v73, 0
    %v84 = vand.u32 %v73, 2139095040
    %v85 = vshrl.u32 %v84, 23
    %v86 = vsub.s32 %v85, 127
    %v87 = vand.u32 2147483647, %v73
    %v88 = vand.u32 %v87, 8388607
    %v89 = vor.u32 %v88, 8388608
    %v90 = vsub.s32 0, %v89
    %v91 = vadd.s32 %v86, 1
    %vm92 = vcmp.gt.s32.totalorder %v91, 0
    %v93 = vsel %vm92, %v91, 0
    %v94 = vshrl.u32 %v93, 5
    %v95 = vand.u32 %v93, 31
    %v96 = vsub.s32 32, %v95
    %v97 = vshrl.u32 683565275, %v96
    %v98 = vshll.u32 683565275, %v95
    %v99 = vshrl.u32 2475754826, %v96
    %v100 = vor.u32 %v98, %v99
    %v101 = vshll.u32 2475754826, %v95
    %v102 = vshrl.u32 2131351028, %v96
    %v103 = vor.u32 %v101, %v102
    %v104 = vshll.u32 2131351028, %v95
    %v105 = vshrl.u32 2102212464, %v96
    %v106 = vor.u32 %v104, %v105
    %v107 = vshll.u32 2102212464, %v95
    %v108 = vshrl.u32 920167782, %v96
    %v109 = vor.u32 %v107, %v108
    %v110 = vshll.u32 920167782, %v95
    %v111 = vshrl.u32 1326507024, %v96
    %v112 = vor.u32 %v110, %v111
    %vm113 = vcmp.lt.s32.totalorder %v94, 1
    %vm114 = vcmp.lt.s32.totalorder %v94, 2
    %vm115 = vcmp.lt.s32.totalorder %v94, 3
    %vm116 = vcmp.lt.s32.totalorder %v94, 4
    %v117 = vsel %vm113, %v97, %v100
    %v118 = vsel %vm116, %v106, 2102212464
    %v119 = vsel %vm115, %v103, %v118
    %v120 = vsel %vm114, %v117, %v119
    %v121 = vsel %vm113, %v100, %v103
    %v122 = vsel %vm116, %v109, 920167782
    %v123 = vsel %vm115, %v106, %v122
    %v124 = vsel %vm114, %v121, %v123
    %v125 = vsel %vm113, %v103, %v106
    %v126 = vsel %vm116, %v112, 1326507024
    %v127 = vsel %vm115, %v109, %v126
    %v128 = vsel %vm114, %v125, %v127
    %v129 = vshll.u32 %v89, 8
    %v130 = vmul.u32.u64.compose %v129, %v128
    %v131 = vextract.low.u32 %v130
    %v132 = vextract.high.u32 %v130
    %v133 = vmul.u32.u64.compose %v129, %v124
    %v134 = vextract.low.u32 %v133
    %v135 = vextract.high.u32 %v133
    %v136 = vmul.u32 %v129, %v120
    %v137 = vadd.s32 %v132, %v134
    %vm138 = vc.u32 %v132, %v134
    %v139 = vadd.s32 %v135, 1
    %v140 = vsel %vm138, %v139, %v135
    %v141 = vadd.s32 %v136, %v140
    %v142 = vadd.s32 %v141, 536870912
    %v143 = vshrl.u32 %v142, 30
    %v144 = vshll.u32 %v143, 30
    %v145 = vsub.s32 %v141, %v144
    %vm146 = vcmp.lt.s32.totalorder %v145, 0
    %v147 = vsub.s32 0, %v145
    %v148 = vsel %vm146, %v147, %v145
    %v149 = vclz %v148
    %v150 = vsub.s32 %v149, 2
    %vm151 = vcmp.gt.s32.totalorder 0, %v150
    %v152 = vsel %vm151, 0, %v150
    %v153 = vsub.s32 32, %v152
    %v154 = vshll.u32 %v145, %v152
    %v155 = vshrl.u32 %v137, %v153
    %v156 = vor.u32 %v154, %v155
    %v157 = vsub.s32 4294967266, %v152
    %v158 = vadd.s32 %v157, 127
    %v159 = vshll.u32 %v158, 23
    %v160 = vor.u32 4788187, %v159
    %v161 = vand.u32 2147483647, %v160
    %v163 = vcvt.s32.f32 %v156
    %v164 = vmul.f32 %v163, %v161
    %v165 = vxor.u32 %v164, 2147483648
    %v166 = vsel %vm83, %v165, %v164
    %v167 = vsub.s32 4, %v143
    %v168 = vsel %vm83, %v167, %v143
    %v169 = vsel %vm82, %v73, %v166
    %v170 = vsel %vm82, 0, %v168
    %v171 = vcosq.f32.pop %v169
    %v172 = vsinq.f32.pop %v169
    %vm173 = vweird.f32 %v73
    %v174 = vadd.s32 %v170, 3
    %v175 = vand.u32 %v174, 3
    %vm176 = vcmp.lt.s32.totalorder %v175, 2
    %vm177 = vcmp.eq.s32.totalorder %v175, 0
    %v178 = vxor.u32 %v172, 2147483648
    %v179 = vsel %vm177, %v171, %v178
    %vm180 = vcmp.eq.s32.totalorder %v175, 2
    %v181 = vxor.u32 %v171, 2147483648
    %v182 = vsel %vm180, %v181, %v172
    %v183 = vsel %vm176, %v179, %v182
    %v184 = vsel %vm173, nan, %v183
    %v185 = vand.u32 2147483647, %v74
    %vm186 = vcmp.le.f32.partialorder %v185, 0.7853982
    %vm187 = vcmp.lt.s32.totalorder %v74, 0
    %v188 = vand.u32 %v74, 2139095040
    %v189 = vshrl.u32 %v188, 23
    %v190 = vsub.s32 %v189, 127
    %v191 = vand.u32 2147483647, %v74
    %v192 = vand.u32 %v191, 8388607
    %v193 = vor.u32 %v192, 8388608
    %v194 = vsub.s32 0, %v193
    %v195 = vadd.s32 %v190, 1
    %vm196 = vcmp.gt.s32.totalorder %v195, 0
    %v197 = vsel %vm196, %v195, 0
    %v198 = vshrl.u32 %v197, 5
    %v199 = vand.u32 %v197, 31
    %v200 = vsub.s32 32, %v199
    %v201 = vshrl.u32 683565275, %v200
    %v202 = vshll.u32 683565275, %v199
    %v203 = vshrl.u32 2475754826, %v200
    %v204 = vor.u32 %v202, %v203
    %v205 = vshll.u32 2475754826, %v199
    %v206 = vshrl.u32 2131351028, %v200
    %v207 = vor.u32 %v205, %v206
    %v208 = vshll.u32 2131351028, %v199
    %v209 = vshrl.u32 2102212464, %v200
    %v210 = vor.u32 %v208, %v209
    %v211 = vshll.u32 2102212464, %v199
    %v212 = vshrl.u32 920167782, %v200
    %v213 = vor.u32 %v211, %v212
    %v214 = vshll.u32 920167782, %v199
    %v215 = vshrl.u32 1326507024, %v200
    %v216 = vor.u32 %v214, %v215
    %vm217 = vcmp.lt.s32.totalorder %v198, 1
    %vm218 = vcmp.lt.s32.totalorder %v198, 2
    %vm219 = vcmp.lt.s32.totalorder %v198, 3
    %vm220 = vcmp.lt.s32.totalorder %v198, 4
    %v221 = vsel %vm217, %v201, %v204
    %v222 = vsel %vm220, %v210, 2102212464
    %v223 = vsel %vm219, %v207, %v222
    %v224 = vsel %vm218, %v221, %v223
    %v225 = vsel %vm217, %v204, %v207
    %v226 = vsel %vm220, %v213, 920167782
    %v227 = vsel %vm219, %v210, %v226
    %v228 = vsel %vm218, %v225, %v227
    %v229 = vsel %vm217, %v207, %v210
    %v230 = vsel %vm220, %v216, 1326507024
    %v231 = vsel %vm219, %v213, %v230
    %v232 = vsel %vm218, %v229, %v231
    %v233 = vshll.u32 %v193, 8
    %v234 = vmul.u32.u64.compose %v233, %v232
    %v235 = vextract.low.u32 %v234
    %v236 = vextract.high.u32 %v234
    %v237 = vmul.u32.u64.compose %v233, %v228
    %v238 = vextract.low.u32 %v237
    %v239 = vextract.high.u32 %v237
    %v240 = vmul.u32 %v233, %v224
    %v241 = vadd.s32 %v236, %v238
    %vm242 = vc.u32 %v236, %v238
    %v243 = vadd.s32 %v239, 1
    %v244 = vsel %vm242, %v243, %v239
    %v245 = vadd.s32 %v240, %v244
    %v246 = vadd.s32 %v245, 536870912
    %v247 = vshrl.u32 %v246, 30
    %v248 = vshll.u32 %v247, 30
    %v249 = vsub.s32 %v245, %v248
    %vm250 = vcmp.lt.s32.totalorder %v249, 0
    %v251 = vsub.s32 0, %v249
    %v252 = vsel %vm250, %v251, %v249
    %v253 = vclz %v252
    %v254 = vsub.s32 %v253, 2
    %vm255 = vcmp.gt.s32.totalorder 0, %v254
    %v256 = vsel %vm255, 0, %v254
    %v257 = vsub.s32 32, %v256
    %v258 = vshll.u32 %v249, %v256
    %v259 = vshrl.u32 %v241, %v257
    %v260 = vor.u32 %v258, %v259
    %v261 = vsub.s32 4294967266, %v256
    %v262 = vadd.s32 %v261, 127
    %v263 = vshll.u32 %v262, 23
    %v264 = vor.u32 4788187, %v263
    %v265 = vand.u32 2147483647, %v264
    %v267 = vcvt.s32.f32 %v260
    %v268 = vmul.f32 %v267, %v265
    %v269 = vxor.u32 %v268, 2147483648
    %v270 = vsel %vm187, %v269, %v268
    %v271 = vsub.s32 4, %v247
    %v272 = vsel %vm187, %v271, %v247
    %v273 = vsel %vm186, %v74, %v270
    %v274 = vsel %vm186, 0, %v272
    %v275 = vcosq.f32.pop %v273
    %v276 = vsinq.f32.pop %v273
    %vm277 = vweird.f32 %v74
    %v278 = vadd.s32 %v274, 3
    %v279 = vand.u32 %v278, 3
    %vm280 = vcmp.lt.s32.totalorder %v279, 2
    %vm281 = vcmp.eq.s32.totalorder %v279, 0
    %v282 = vxor.u32 %v276, 2147483648
    %v283 = vsel %vm281, %v275, %v282
    %vm284 = vcmp.eq.s32.totalorder %v279, 2
    %v285 = vxor.u32 %v275, 2147483648
    %v286 = vsel %vm284, %v285, %v276
    %v287 = vsel %vm280, %v283, %v286
    %v288 = vsel %vm277, nan, %v287
    %v289 = vand.u32 2147483647, %v75
    %vm290 = vcmp.le.f32.partialorder %v289, 0.7853982
    %vm291 = vcmp.lt.s32.totalorder %v75, 0
    %v292 = vand.u32 %v75, 2139095040
    %v293 = vshrl.u32 %v292, 23
    %v294 = vsub.s32 %v293, 127
    %v295 = vand.u32 2147483647, %v75
    %v296 = vand.u32 %v295, 8388607
    %v297 = vor.u32 %v296, 8388608
    %v298 = vsub.s32 0, %v297
    %v299 = vadd.s32 %v294, 1
    %vm300 = vcmp.gt.s32.totalorder %v299, 0
    %v301 = vsel %vm300, %v299, 0
    %v302 = vshrl.u32 %v301, 5
    %v303 = vand.u32 %v301, 31
    %v304 = vsub.s32 32, %v303
    %v305 = vshrl.u32 683565275, %v304
    %v306 = vshll.u32 683565275, %v303
    %v307 = vshrl.u32 2475754826, %v304
    %v308 = vor.u32 %v306, %v307
    %v309 = vshll.u32 2475754826, %v303
    %v310 = vshrl.u32 2131351028, %v304
    %v311 = vor.u32 %v309, %v310
    %v312 = vshll.u32 2131351028, %v303
    %v313 = vshrl.u32 2102212464, %v304
    %v314 = vor.u32 %v312, %v313
    %v315 = vshll.u32 2102212464, %v303
    %v316 = vshrl.u32 920167782, %v304
    %v317 = vor.u32 %v315, %v316
    %v318 = vshll.u32 920167782, %v303
    %v319 = vshrl.u32 1326507024, %v304
    %v320 = vor.u32 %v318, %v319
    %vm321 = vcmp.lt.s32.totalorder %v302, 1
    %vm322 = vcmp.lt.s32.totalorder %v302, 2
    %vm323 = vcmp.lt.s32.totalorder %v302, 3
    %vm324 = vcmp.lt.s32.totalorder %v302, 4
    %v325 = vsel %vm321, %v305, %v308
    %v326 = vsel %vm324, %v314, 2102212464
    %v327 = vsel %vm323, %v311, %v326
    %v328 = vsel %vm322, %v325, %v327
    %v329 = vsel %vm321, %v308, %v311
    %v330 = vsel %vm324, %v317, 920167782
    %v331 = vsel %vm323, %v314, %v330
    %v332 = vsel %vm322, %v329, %v331
    %v333 = vsel %vm321, %v311, %v314
    %v334 = vsel %vm324, %v320, 1326507024
    %v335 = vsel %vm323, %v317, %v334
    %v336 = vsel %vm322, %v333, %v335
    %v337 = vshll.u32 %v297, 8
    %v338 = vmul.u32.u64.compose %v337, %v336
    %v339 = vextract.low.u32 %v338
    %v340 = vextract.high.u32 %v338
    %v341 = vmul.u32.u64.compose %v337, %v332
    %v342 = vextract.low.u32 %v341
    %v343 = vextract.high.u32 %v341
    %v344 = vmul.u32 %v337, %v328
    %v345 = vadd.s32 %v340, %v342
    %vm346 = vc.u32 %v340, %v342
    %v347 = vadd.s32 %v343, 1
    %v348 = vsel %vm346, %v347, %v343
    %v349 = vadd.s32 %v344, %v348
    %v350 = vadd.s32 %v349, 536870912
    %v351 = vshrl.u32 %v350, 30
    %v352 = vshll.u32 %v351, 30
    %v353 = vsub.s32 %v349, %v352
    %vm354 = vcmp.lt.s32.totalorder %v353, 0
    %v355 = vsub.s32 0, %v353
    %v356 = vsel %vm354, %v355, %v353
    %v357 = vclz %v356
    %v358 = vsub.s32 %v357, 2
    %vm359 = vcmp.gt.s32.totalorder 0, %v358
    %v360 = vsel %vm359, 0, %v358
    %v361 = vsub.s32 32, %v360
    %v362 = vshll.u32 %v353, %v360
    %v363 = vshrl.u32 %v345, %v361
    %v364 = vor.u32 %v362, %v363
    %v365 = vsub.s32 4294967266, %v360
    %v366 = vadd.s32 %v365, 127
    %v367 = vshll.u32 %v366, 23
    %v368 = vor.u32 4788187, %v367
    %v369 = vand.u32 2147483647, %v368
    %v371 = vcvt.s32.f32 %v364
    %v372 = vmul.f32 %v371, %v369
    %v373 = vxor.u32 %v372, 2147483648
    %v374 = vsel %vm291, %v373, %v372
    %v375 = vsub.s32 4, %v351
    %v376 = vsel %vm291, %v375, %v351
    %v377 = vsel %vm290, %v75, %v374
    %v378 = vsel %vm290, 0, %v376
    %v379 = vcosq.f32.pop %v377
    %v380 = vsinq.f32.pop %v377
    %vm381 = vweird.f32 %v75
    %v382 = vadd.s32 %v378, 3
    %v383 = vand.u32 %v382, 3
    %vm384 = vcmp.lt.s32.totalorder %v383, 2
    %vm385 = vcmp.eq.s32.totalorder %v383, 0
    %v386 = vxor.u32 %v380, 2147483648
    %v387 = vsel %vm385, %v379, %v386
    %vm388 = vcmp.eq.s32.totalorder %v383, 2
    %v389 = vxor.u32 %v379, 2147483648
    %v390 = vsel %vm388, %v389, %v380
    %v391 = vsel %vm384, %v387, %v390
    %v392 = vsel %vm381, nan, %v391
    %v393 = vand.u32 2147483647, %v76
    %vm394 = vcmp.le.f32.partialorder %v393, 0.7853982
    %vm395 = vcmp.lt.s32.totalorder %v76, 0
    %v396 = vand.u32 %v76, 2139095040
    %v397 = vshrl.u32 %v396, 23
    %v398 = vsub.s32 %v397, 127
    %v399 = vand.u32 2147483647, %v76
    %v400 = vand.u32 %v399, 8388607
    %v401 = vor.u32 %v400, 8388608
    %v402 = vsub.s32 0, %v401
    %v403 = vadd.s32 %v398, 1
    %vm404 = vcmp.gt.s32.totalorder %v403, 0
    %v405 = vsel %vm404, %v403, 0
    %v406 = vshrl.u32 %v405, 5
    %v407 = vand.u32 %v405, 31
    %v408 = vsub.s32 32, %v407
    %v409 = vshrl.u32 683565275, %v408
    %v410 = vshll.u32 683565275, %v407
    %v411 = vshrl.u32 2475754826, %v408
    %v412 = vor.u32 %v410, %v411
    %v413 = vshll.u32 2475754826, %v407
    %v414 = vshrl.u32 2131351028, %v408
    %v415 = vor.u32 %v413, %v414
    %v416 = vshll.u32 2131351028, %v407
    %v417 = vshrl.u32 2102212464, %v408
    %v418 = vor.u32 %v416, %v417
    %v419 = vshll.u32 2102212464, %v407
    %v420 = vshrl.u32 920167782, %v408
    %v421 = vor.u32 %v419, %v420
    %v422 = vshll.u32 920167782, %v407
    %v423 = vshrl.u32 1326507024, %v408
    %v424 = vor.u32 %v422, %v423
    %vm425 = vcmp.lt.s32.totalorder %v406, 1
    %vm426 = vcmp.lt.s32.totalorder %v406, 2
    %vm427 = vcmp.lt.s32.totalorder %v406, 3
    %vm428 = vcmp.lt.s32.totalorder %v406, 4
    %v429 = vsel %vm425, %v409, %v412
    %v430 = vsel %vm428, %v418, 2102212464
    %v431 = vsel %vm427, %v415, %v430
    %v432 = vsel %vm426, %v429, %v431
    %v433 = vsel %vm425, %v412, %v415
    %v434 = vsel %vm428, %v421, 920167782
    %v435 = vsel %vm427, %v418, %v434
    %v436 = vsel %vm426, %v433, %v435
    %v437 = vsel %vm425, %v415, %v418
    %v438 = vsel %vm428, %v424, 1326507024
    %v439 = vsel %vm427, %v421, %v438
    %v440 = vsel %vm426, %v437, %v439
    %v441 = vshll.u32 %v401, 8
    %v442 = vmul.u32.u64.compose %v441, %v440
    %v443 = vextract.low.u32 %v442
    %v444 = vextract.high.u32 %v442
    %v445 = vmul.u32.u64.compose %v441, %v436
    %v446 = vextract.low.u32 %v445
    %v447 = vextract.high.u32 %v445
    %v448 = vmul.u32 %v441, %v432
    %v449 = vadd.s32 %v444, %v446
    %vm450 = vc.u32 %v444, %v446
    %v451 = vadd.s32 %v447, 1
    %v452 = vsel %vm450, %v451, %v447
    %v453 = vadd.s32 %v448, %v452
    %v454 = vadd.s32 %v453, 536870912
    %v455 = vshrl.u32 %v454, 30
    %v456 = vshll.u32 %v455, 30
    %v457 = vsub.s32 %v453, %v456
    %vm458 = vcmp.lt.s32.totalorder %v457, 0
    %v459 = vsub.s32 0, %v457
    %v460 = vsel %vm458, %v459, %v457
    %v461 = vclz %v460
    %v462 = vsub.s32 %v461, 2
    %vm463 = vcmp.gt.s32.totalorder 0, %v462
    %v464 = vsel %vm463, 0, %v462
    %v465 = vsub.s32 32, %v464
    %v466 = vshll.u32 %v457, %v464
    %v467 = vshrl.u32 %v449, %v465
    %v468 = vor.u32 %v466, %v467
    %v469 = vsub.s32 4294967266, %v464
    %v470 = vadd.s32 %v469, 127
    %v471 = vshll.u32 %v470, 23
    %v472 = vor.u32 4788187, %v471
    %v473 = vand.u32 2147483647, %v472
    %v475 = vcvt.s32.f32 %v468
    %v476 = vmul.f32 %v475, %v473
    %v477 = vxor.u32 %v476, 2147483648
    %v478 = vsel %vm395, %v477, %v476
    %v479 = vsub.s32 4, %v455
    %v480 = vsel %vm395, %v479, %v455
    %v481 = vsel %vm394, %v76, %v478
    %v482 = vsel %vm394, 0, %v480
    %v483 = vcosq.f32.pop %v481
    %v484 = vsinq.f32.pop %v481
    %vm485 = vweird.f32 %v76
    %v486 = vadd.s32 %v482, 3
    %v487 = vand.u32 %v486, 3
    %vm488 = vcmp.lt.s32.totalorder %v487, 2
    %vm489 = vcmp.eq.s32.totalorder %v487, 0
    %v490 = vxor.u32 %v484, 2147483648
    %v491 = vsel %vm489, %v483, %v490
    %vm492 = vcmp.eq.s32.totalorder %v487, 2
    %v493 = vxor.u32 %v483, 2147483648
    %v494 = vsel %vm492, %v493, %v484
    %v495 = vsel %vm488, %v491, %v494
    %v496 = vsel %vm485, nan, %v495
    %v497 = vand.u32 2147483647, %v77
    %vm498 = vcmp.le.f32.partialorder %v497, 0.7853982
    %vm499 = vcmp.lt.s32.totalorder %v77, 0
    %v500 = vand.u32 %v77, 2139095040
    %v501 = vshrl.u32 %v500, 23
    %v502 = vsub.s32 %v501, 127
    %v503 = vand.u32 2147483647, %v77
    %v504 = vand.u32 %v503, 8388607
    %v505 = vor.u32 %v504, 8388608
    %v506 = vsub.s32 0, %v505
    %v507 = vadd.s32 %v502, 1
    %vm508 = vcmp.gt.s32.totalorder %v507, 0
    %v509 = vsel %vm508, %v507, 0
    %v510 = vshrl.u32 %v509, 5
    %v511 = vand.u32 %v509, 31
    %v512 = vsub.s32 32, %v511
    %v513 = vshrl.u32 683565275, %v512
    %v514 = vshll.u32 683565275, %v511
    %v515 = vshrl.u32 2475754826, %v512
    %v516 = vor.u32 %v514, %v515
    %v517 = vshll.u32 2475754826, %v511
    %v518 = vshrl.u32 2131351028, %v512
    %v519 = vor.u32 %v517, %v518
    %v520 = vshll.u32 2131351028, %v511
    %v521 = vshrl.u32 2102212464, %v512
    %v522 = vor.u32 %v520, %v521
    %v523 = vshll.u32 2102212464, %v511
    %v524 = vshrl.u32 920167782, %v512
    %v525 = vor.u32 %v523, %v524
    %v526 = vshll.u32 920167782, %v511
    %v527 = vshrl.u32 1326507024, %v512
    %v528 = vor.u32 %v526, %v527
    %vm529 = vcmp.lt.s32.totalorder %v510, 1
    %vm530 = vcmp.lt.s32.totalorder %v510, 2
    %vm531 = vcmp.lt.s32.totalorder %v510, 3
    %vm532 = vcmp.lt.s32.totalorder %v510, 4
    %v533 = vsel %vm529, %v513, %v516
    %v534 = vsel %vm532, %v522, 2102212464
    %v535 = vsel %vm531, %v519, %v534
    %v536 = vsel %vm530, %v533, %v535
    %v537 = vsel %vm529, %v516, %v519
    %v538 = vsel %vm532, %v525, 920167782
    %v539 = vsel %vm531, %v522, %v538
    %v540 = vsel %vm530, %v537, %v539
    %v541 = vsel %vm529, %v519, %v522
    %v542 = vsel %vm532, %v528, 1326507024
    %v543 = vsel %vm531, %v525, %v542
    %v544 = vsel %vm530, %v541, %v543
    %v545 = vshll.u32 %v505, 8
    %v546 = vmul.u32.u64.compose %v545, %v544
    %v547 = vextract.low.u32 %v546
    %v548 = vextract.high.u32 %v546
    %v549 = vmul.u32.u64.compose %v545, %v540
    %v550 = vextract.low.u32 %v549
    %v551 = vextract.high.u32 %v549
    %v552 = vmul.u32 %v545, %v536
    %v553 = vadd.s32 %v548, %v550
    %vm554 = vc.u32 %v548, %v550
    %v555 = vadd.s32 %v551, 1
    %v556 = vsel %vm554, %v555, %v551
    %v557 = vadd.s32 %v552, %v556
    %v558 = vadd.s32 %v557, 536870912
    %v559 = vshrl.u32 %v558, 30
    %v560 = vshll.u32 %v559, 30
    %v561 = vsub.s32 %v557, %v560
    %vm562 = vcmp.lt.s32.totalorder %v561, 0
    %v563 = vsub.s32 0, %v561
    %v564 = vsel %vm562, %v563, %v561
    %v565 = vclz %v564
    %v566 = vsub.s32 %v565, 2
    %vm567 = vcmp.gt.s32.totalorder 0, %v566
    %v568 = vsel %vm567, 0, %v566
    %v569 = vsub.s32 32, %v568
    %v570 = vshll.u32 %v561, %v568
    %v571 = vshrl.u32 %v553, %v569
    %v572 = vor.u32 %v570, %v571
    %v573 = vsub.s32 4294967266, %v568
    %v574 = vadd.s32 %v573, 127
    %v575 = vshll.u32 %v574, 23
    %v576 = vor.u32 4788187, %v575
    %v577 = vand.u32 2147483647, %v576
    %v579 = vcvt.s32.f32 %v572
    %v580 = vmul.f32 %v579, %v577
    %v581 = vxor.u32 %v580, 2147483648
    %v582 = vsel %vm499, %v581, %v580
    %v583 = vsub.s32 4, %v559
    %v584 = vsel %vm499, %v583, %v559
    %v585 = vsel %vm498, %v77, %v582
    %v586 = vsel %vm498, 0, %v584
    %v587 = vcosq.f32.pop %v585
    %v588 = vsinq.f32.pop %v585
    %vm589 = vweird.f32 %v77
    %v590 = vadd.s32 %v586, 3
    %v591 = vand.u32 %v590, 3
    %vm592 = vcmp.lt.s32.totalorder %v591, 2
    %vm593 = vcmp.eq.s32.totalorder %v591, 0
    %v594 = vxor.u32 %v588, 2147483648
    %v595 = vsel %vm593, %v587, %v594
    %vm596 = vcmp.eq.s32.totalorder %v591, 2
    %v597 = vxor.u32 %v587, 2147483648
    %v598 = vsel %vm596, %v597, %v588
    %v599 = vsel %vm592, %v595, %v598
    %v600 = vsel %vm589, nan, %v599
    %v601 = vand.u32 2147483647, %v78
    %vm602 = vcmp.le.f32.partialorder %v601, 0.7853982
    %vm603 = vcmp.lt.s32.totalorder %v78, 0
    %v604 = vand.u32 %v78, 2139095040
    %v605 = vshrl.u32 %v604, 23
    %v606 = vsub.s32 %v605, 127
    %v607 = vand.u32 2147483647, %v78
    %v608 = vand.u32 %v607, 8388607
    %v609 = vor.u32 %v608, 8388608
    %v610 = vsub.s32 0, %v609
    %v611 = vadd.s32 %v606, 1
    %vm612 = vcmp.gt.s32.totalorder %v611, 0
    %v613 = vsel %vm612, %v611, 0
    %v614 = vshrl.u32 %v613, 5
    %v615 = vand.u32 %v613, 31
    %v616 = vsub.s32 32, %v615
    %v617 = vshrl.u32 683565275, %v616
    %v618 = vshll.u32 683565275, %v615
    %v619 = vshrl.u32 2475754826, %v616
    %v620 = vor.u32 %v618, %v619
    %v621 = vshll.u32 2475754826, %v615
    %v622 = vshrl.u32 2131351028, %v616
    %v623 = vor.u32 %v621, %v622
    %v624 = vshll.u32 2131351028, %v615
    %v625 = vshrl.u32 2102212464, %v616
    %v626 = vor.u32 %v624, %v625
    %v627 = vshll.u32 2102212464, %v615
    %v628 = vshrl.u32 920167782, %v616
    %v629 = vor.u32 %v627, %v628
    %v630 = vshll.u32 920167782, %v615
    %v631 = vshrl.u32 1326507024, %v616
    %v632 = vor.u32 %v630, %v631
    %vm633 = vcmp.lt.s32.totalorder %v614, 1
    %vm634 = vcmp.lt.s32.totalorder %v614, 2
    %vm635 = vcmp.lt.s32.totalorder %v614, 3
    %vm636 = vcmp.lt.s32.totalorder %v614, 4
    %v637 = vsel %vm633, %v617, %v620
    %v638 = vsel %vm636, %v626, 2102212464
    %v639 = vsel %vm635, %v623, %v638
    %v640 = vsel %vm634, %v637, %v639
    %v641 = vsel %vm633, %v620, %v623
    %v642 = vsel %vm636, %v629, 920167782
    %v643 = vsel %vm635, %v626, %v642
    %v644 = vsel %vm634, %v641, %v643
    %v645 = vsel %vm633, %v623, %v626
    %v646 = vsel %vm636, %v632, 1326507024
    %v647 = vsel %vm635, %v629, %v646
    %v648 = vsel %vm634, %v645, %v647
    %v649 = vshll.u32 %v609, 8
    %v650 = vmul.u32.u64.compose %v649, %v648
    %v651 = vextract.low.u32 %v650
    %v652 = vextract.high.u32 %v650
    %v653 = vmul.u32.u64.compose %v649, %v644
    %v654 = vextract.low.u32 %v653
    %v655 = vextract.high.u32 %v653
    %v656 = vmul.u32 %v649, %v640
    %v657 = vadd.s32 %v652, %v654
    %vm658 = vc.u32 %v652, %v654
    %v659 = vadd.s32 %v655, 1
    %v660 = vsel %vm658, %v659, %v655
    %v661 = vadd.s32 %v656, %v660
    %v662 = vadd.s32 %v661, 536870912
    %v663 = vshrl.u32 %v662, 30
    %v664 = vshll.u32 %v663, 30
    %v665 = vsub.s32 %v661, %v664
    %vm666 = vcmp.lt.s32.totalorder %v665, 0
    %v667 = vsub.s32 0, %v665
    %v668 = vsel %vm666, %v667, %v665
    %v669 = vclz %v668
    %v670 = vsub.s32 %v669, 2
    %vm671 = vcmp.gt.s32.totalorder 0, %v670
    %v672 = vsel %vm671, 0, %v670
    %v673 = vsub.s32 32, %v672
    %v674 = vshll.u32 %v665, %v672
    %v675 = vshrl.u32 %v657, %v673
    %v676 = vor.u32 %v674, %v675
    %v677 = vsub.s32 4294967266, %v672
    %v678 = vadd.s32 %v677, 127
    %v679 = vshll.u32 %v678, 23
    %v680 = vor.u32 4788187, %v679
    %v681 = vand.u32 2147483647, %v680
    %v683 = vcvt.s32.f32 %v676
    %v684 = vmul.f32 %v683, %v681
    %v685 = vxor.u32 %v684, 2147483648
    %v686 = vsel %vm603, %v685, %v684
    %v687 = vsub.s32 4, %v663
    %v688 = vsel %vm603, %v687, %v663
    %v689 = vsel %vm602, %v78, %v686
    %v690 = vsel %vm602, 0, %v688
    %v691 = vcosq.f32.pop %v689
    %v692 = vsinq.f32.pop %v689
    %vm693 = vweird.f32 %v78
    %v694 = vadd.s32 %v690, 3
    %v695 = vand.u32 %v694, 3
    %vm696 = vcmp.lt.s32.totalorder %v695, 2
    %vm697 = vcmp.eq.s32.totalorder %v695, 0
    %v698 = vxor.u32 %v692, 2147483648
    %v699 = vsel %vm697, %v691, %v698
    %vm700 = vcmp.eq.s32.totalorder %v695, 2
    %v701 = vxor.u32 %v691, 2147483648
    %v702 = vsel %vm700, %v701, %v692
    %v703 = vsel %vm696, %v699, %v702
    %v704 = vsel %vm693, nan, %v703
    %v705 = vand.u32 2147483647, %v79
    %vm706 = vcmp.le.f32.partialorder %v705, 0.7853982
    %vm707 = vcmp.lt.s32.totalorder %v79, 0
    %v708 = vand.u32 %v79, 2139095040
    %v709 = vshrl.u32 %v708, 23
    %v710 = vsub.s32 %v709, 127
    %v711 = vand.u32 2147483647, %v79
    %v712 = vand.u32 %v711, 8388607
    %v713 = vor.u32 %v712, 8388608
    %v714 = vsub.s32 0, %v713
    %v715 = vadd.s32 %v710, 1
    %vm716 = vcmp.gt.s32.totalorder %v715, 0
    %v717 = vsel %vm716, %v715, 0
    %v718 = vshrl.u32 %v717, 5
    %v719 = vand.u32 %v717, 31
    %v720 = vsub.s32 32, %v719
    %v721 = vshrl.u32 683565275, %v720
    %v722 = vshll.u32 683565275, %v719
    %v723 = vshrl.u32 2475754826, %v720
    %v724 = vor.u32 %v722, %v723
    %v725 = vshll.u32 2475754826, %v719
    %v726 = vshrl.u32 2131351028, %v720
    %v727 = vor.u32 %v725, %v726
    %v728 = vshll.u32 2131351028, %v719
    %v729 = vshrl.u32 2102212464, %v720
    %v730 = vor.u32 %v728, %v729
    %v731 = vshll.u32 2102212464, %v719
    %v732 = vshrl.u32 920167782, %v720
    %v733 = vor.u32 %v731, %v732
    %v734 = vshll.u32 920167782, %v719
    %v735 = vshrl.u32 1326507024, %v720
    %v736 = vor.u32 %v734, %v735
    %vm737 = vcmp.lt.s32.totalorder %v718, 1
    %vm738 = vcmp.lt.s32.totalorder %v718, 2
    %vm739 = vcmp.lt.s32.totalorder %v718, 3
    %vm740 = vcmp.lt.s32.totalorder %v718, 4
    %v741 = vsel %vm737, %v721, %v724
    %v742 = vsel %vm740, %v730, 2102212464
    %v743 = vsel %vm739, %v727, %v742
    %v744 = vsel %vm738, %v741, %v743
    %v745 = vsel %vm737, %v724, %v727
    %v746 = vsel %vm740, %v733, 920167782
    %v747 = vsel %vm739, %v730, %v746
    %v748 = vsel %vm738, %v745, %v747
    %v749 = vsel %vm737, %v727, %v730
    %v750 = vsel %vm740, %v736, 1326507024
    %v751 = vsel %vm739, %v733, %v750
    %v752 = vsel %vm738, %v749, %v751
    %v753 = vshll.u32 %v713, 8
    %v754 = vmul.u32.u64.compose %v753, %v752
    %v755 = vextract.low.u32 %v754
    %v756 = vextract.high.u32 %v754
    %v757 = vmul.u32.u64.compose %v753, %v748
    %v758 = vextract.low.u32 %v757
    %v759 = vextract.high.u32 %v757
    %v760 = vmul.u32 %v753, %v744
    %v761 = vadd.s32 %v756, %v758
    %vm762 = vc.u32 %v756, %v758
    %v763 = vadd.s32 %v759, 1
    %v764 = vsel %vm762, %v763, %v759
    %v765 = vadd.s32 %v760, %v764
    %v766 = vadd.s32 %v765, 536870912
    %v767 = vshrl.u32 %v766, 30
    %v768 = vshll.u32 %v767, 30
    %v769 = vsub.s32 %v765, %v768
    %vm770 = vcmp.lt.s32.totalorder %v769, 0
    %v771 = vsub.s32 0, %v769
    %v772 = vsel %vm770, %v771, %v769
    %v773 = vclz %v772
    %v774 = vsub.s32 %v773, 2
    %vm775 = vcmp.gt.s32.totalorder 0, %v774
    %v776 = vsel %vm775, 0, %v774
    %v777 = vsub.s32 32, %v776
    %v778 = vshll.u32 %v769, %v776
    %v779 = vshrl.u32 %v761, %v777
    %v780 = vor.u32 %v778, %v779
    %v781 = vsub.s32 4294967266, %v776
    %v782 = vadd.s32 %v781, 127
    %v783 = vshll.u32 %v782, 23
    %v784 = vor.u32 4788187, %v783
    %v785 = vand.u32 2147483647, %v784
    %v787 = vcvt.s32.f32 %v780
    %v788 = vmul.f32 %v787, %v785
    %v789 = vxor.u32 %v788, 2147483648
    %v790 = vsel %vm707, %v789, %v788
    %v791 = vsub.s32 4, %v767
    %v792 = vsel %vm707, %v791, %v767
    %v793 = vsel %vm706, %v79, %v790
    %v794 = vsel %vm706, 0, %v792
    %v795 = vcosq.f32.pop %v793
    %v796 = vsinq.f32.pop %v793
    %vm797 = vweird.f32 %v79
    %v798 = vadd.s32 %v794, 3
    %v799 = vand.u32 %v798, 3
    %vm800 = vcmp.lt.s32.totalorder %v799, 2
    %vm801 = vcmp.eq.s32.totalorder %v799, 0
    %v802 = vxor.u32 %v796, 2147483648
    %v803 = vsel %vm801, %v795, %v802
    %vm804 = vcmp.eq.s32.totalorder %v799, 2
    %v805 = vxor.u32 %v795, 2147483648
    %v806 = vsel %vm804, %v805, %v796
    %v807 = vsel %vm800, %v803, %v806
    %v808 = vsel %vm797, nan, %v807
    %v809 = vand.u32 2147483647, %v80
    %vm810 = vcmp.le.f32.partialorder %v809, 0.7853982
    %vm811 = vcmp.lt.s32.totalorder %v80, 0
    %v812 = vand.u32 %v80, 2139095040
    %v813 = vshrl.u32 %v812, 23
    %v814 = vsub.s32 %v813, 127
    %v815 = vand.u32 2147483647, %v80
    %v816 = vand.u32 %v815, 8388607
    %v817 = vor.u32 %v816, 8388608
    %v818 = vsub.s32 0, %v817
    %v819 = vadd.s32 %v814, 1
    %vm820 = vcmp.gt.s32.totalorder %v819, 0
    %v821 = vsel %vm820, %v819, 0
    %v822 = vshrl.u32 %v821, 5
    %v823 = vand.u32 %v821, 31
    %v824 = vsub.s32 32, %v823
    %v825 = vshrl.u32 683565275, %v824
    %v826 = vshll.u32 683565275, %v823
    %v827 = vshrl.u32 2475754826, %v824
    %v828 = vor.u32 %v826, %v827
    %v829 = vshll.u32 2475754826, %v823
    %v830 = vshrl.u32 2131351028, %v824
    %v831 = vor.u32 %v829, %v830
    %v832 = vshll.u32 2131351028, %v823
    %v833 = vshrl.u32 2102212464, %v824
    %v834 = vor.u32 %v832, %v833
    %v835 = vshll.u32 2102212464, %v823
    %v836 = vshrl.u32 920167782, %v824
    %v837 = vor.u32 %v835, %v836
    %v838 = vshll.u32 920167782, %v823
    %v839 = vshrl.u32 1326507024, %v824
    %v840 = vor.u32 %v838, %v839
    %vm841 = vcmp.lt.s32.totalorder %v822, 1
    %vm842 = vcmp.lt.s32.totalorder %v822, 2
    %vm843 = vcmp.lt.s32.totalorder %v822, 3
    %vm844 = vcmp.lt.s32.totalorder %v822, 4
    %v845 = vsel %vm841, %v825, %v828
    %v846 = vsel %vm844, %v834, 2102212464
    %v847 = vsel %vm843, %v831, %v846
    %v848 = vsel %vm842, %v845, %v847
    %v849 = vsel %vm841, %v828, %v831
    %v850 = vsel %vm844, %v837, 920167782
    %v851 = vsel %vm843, %v834, %v850
    %v852 = vsel %vm842, %v849, %v851
    %v853 = vsel %vm841, %v831, %v834
    %v854 = vsel %vm844, %v840, 1326507024
    %v855 = vsel %vm843, %v837, %v854
    %v856 = vsel %vm842, %v853, %v855
    %v857 = vshll.u32 %v817, 8
    %v858 = vmul.u32.u64.compose %v857, %v856
    %v859 = vextract.low.u32 %v858
    %v860 = vextract.high.u32 %v858
    %v861 = vmul.u32.u64.compose %v857, %v852
    %v862 = vextract.low.u32 %v861
    %v863 = vextract.high.u32 %v861
    %v864 = vmul.u32 %v857, %v848
    %v865 = vadd.s32 %v860, %v862
    %vm866 = vc.u32 %v860, %v862
    %v867 = vadd.s32 %v863, 1
    %v868 = vsel %vm866, %v867, %v863
    %v869 = vadd.s32 %v864, %v868
    %v870 = vadd.s32 %v869, 536870912
    %v871 = vshrl.u32 %v870, 30
    %v872 = vshll.u32 %v871, 30
    %v873 = vsub.s32 %v869, %v872
    %vm874 = vcmp.lt.s32.totalorder %v873, 0
    %v875 = vsub.s32 0, %v873
    %v876 = vsel %vm874, %v875, %v873
    %v877 = vclz %v876
    %v878 = vsub.s32 %v877, 2
    %vm879 = vcmp.gt.s32.totalorder 0, %v878
    %v880 = vsel %vm879, 0, %v878
    %v881 = vsub.s32 32, %v880
    %v882 = vshll.u32 %v873, %v880
    %v883 = vshrl.u32 %v865, %v881
    %v884 = vor.u32 %v882, %v883
    %v885 = vsub.s32 4294967266, %v880
    %v886 = vadd.s32 %v885, 127
    %v887 = vshll.u32 %v886, 23
    %v888 = vor.u32 4788187, %v887
    %v889 = vand.u32 2147483647, %v888
    %v891 = vcvt.s32.f32 %v884
    %v892 = vmul.f32 %v891, %v889
    %v893 = vxor.u32 %v892, 2147483648
    %v894 = vsel %vm811, %v893, %v892
    %v895 = vsub.s32 4, %v871
    %v896 = vsel %vm811, %v895, %v871
    %v897 = vsel %vm810, %v80, %v894
    %v898 = vsel %vm810, 0, %v896
    %v899 = vcosq.f32.pop %v897
    %v900 = vsinq.f32.pop %v897
    %vm901 = vweird.f32 %v80
    %v902 = vadd.s32 %v898, 3
    %v903 = vand.u32 %v902, 3
    %vm904 = vcmp.lt.s32.totalorder %v903, 2
    %vm905 = vcmp.eq.s32.totalorder %v903, 0
    %v906 = vxor.u32 %v900, 2147483648
    %v907 = vsel %vm905, %v899, %v906
    %vm908 = vcmp.eq.s32.totalorder %v903, 2
    %v909 = vxor.u32 %v899, 2147483648
    %v910 = vsel %vm908, %v909, %v900
    %v911 = vsel %vm904, %v907, %v910
    %v912 = vsel %vm901, nan, %v911
    %913 = vst [vmem:[#allocation5] sm:$0xff] %v184
    %914 = vst [vmem:[#allocation5 + $0x8] sm:$0xff] %v288
    %915 = vst [vmem:[#allocation5 + $0x10] sm:$0xff] %v392
    %916 = vst [vmem:[#allocation5 + $0x18] sm:$0xff] %v496
    %917 = vst [vmem:[#allocation5 + $0x20] sm:$0xff] %v600
    %918 = vst [vmem:[#allocation5 + $0x28] sm:$0xff] %v704
    %919 = vst [vmem:[#allocation5 + $0x30] sm:$0xff] %v808
    %920 = vst [vmem:[#allocation5 + $0x38] sm:$0xff] %v912
    // Predicated region
    $region14: #{tpu_custom_call.1} parent=1 // pred_check
      _
    $region15: #{tpu_custom_call.1} parent=1 // pred_check_branch
      %922 = sbr.rel (0) target = $region17
    $region16: #{tpu_custom_call.1} parent=1 // pred_region
      %s924 = ssub.s32 1024, 1024
      %925 = vsyncadd [#allocation4], %s924
      %s926 = sshll.u32 [#allocation5], 4
      %s927 = int_to_ptr.vmem [resolvable:$true] %s926
      %932 = dma.vmem_to_hbm [thread:$0]  %s927, 1024, %s2, [#allocation4], 128, 128, 8
    $region17: #{tpu_custom_call.1} parent=1 // pred_fallthru
      _
    // Predicated region
    $region18: #{tpu_custom_call.1} parent=1 // pred_check
      _
    $region19: #{tpu_custom_call.1} parent=1 // pred_check_branch
      %934 = sbr.rel (0) target = $region21
    $region20: #{tpu_custom_call.1} parent=1 // pred_region
      %935 = dma.done [#allocation4], 1024
    $region21: #{tpu_custom_call.1} parent=1 // pred_fallthru
      _
    %936 = vsyncpa [#allocation3], 1
    %937 = vsyncpa [#allocation4], 1

</llo_original>
